<compile_context>
chip_gen: v5e
topology: v5e:2x2
jax: 0.10.0
libtpu: 0.0.40
codegen_flags: <defaults>
</compile_context>

<pallas_src>
import functools

import jax
import jax.numpy as jnp
from jax.experimental import pallas as pl
from jax.experimental.pallas import tpu as pltpu


def _round_up(n: int, m: int) -> int:
    return ((n + m - 1) // m) * m


def _linear_kernel(x_ref, w_ref, o_ref):
    # x_ref: (TM, K)   w_ref: (K, N)   o_ref: (TM, N)
    o_ref[...] = jnp.dot(
        x_ref[...], w_ref[...], preferred_element_type=jnp.float32
    ).astype(o_ref.dtype)


@functools.partial(jax.jit, static_argnames=("block_rows",))
def time_feature_embedding_pallas(x, weight, block_rows: int = 4096):
    """x: (B, L, d_inp), weight: (d_model, d_inp) (PyTorch nn.Linear layout).

    Returns (B, L, d_model) = x @ weight.T  (no bias).
    """
    B, L, d_inp = x.shape
    d_model = weight.shape[0]
    rows = B * L

    x_flat = x.reshape(rows, d_inp)
    w_t = weight.T.astype(x.dtype)  # (d_inp, d_model)

    # ---- choose layout -------------------------------------------------
    # Lane-dense slab when d_model divides 128 and the row count cooperates.
    group = 128 // d_model if (d_model < 128 and 128 % d_model == 0) else 1
    use_slab = group > 1 and rows % group == 0
    if use_slab:
        k = group * d_inp
        n = group * d_model  # == 128
        rows_eff = rows // group
        # Super-row r = [x[rG], x[rG+1], ..., x[rG+G-1]] concatenated along K.
        x_eff = x_flat.reshape(rows_eff, k)
        # Block-diagonal weight: super-row @ w_eff = the G output rows
        # concatenated along the 128 lanes.
        w_eff = jnp.kron(jnp.eye(group, dtype=w_t.dtype), w_t)  # (k, 128)
    else:
        # Unpadded output: if d_model % 128 != 0 the tail stores are masked
        # (vst.msk) but only the real bytes are written.
        k, n, rows_eff = d_inp, d_model, rows
        x_eff, w_eff = x_flat, w_t

    # ---- row tiling ------------------------------------------------------
    # Big tiles amortize per-grid-step overhead; cap so we keep >= 4 grid
    # steps when there are enough rows (lets v7x's two TensorCores both get
    # work).  At tm=4096, d_model<=512 f32 the double-buffered VMEM footprint
    # stays ~<=20 MiB, inside the 32 MiB scoped limit on v5e/v6e/v7x.
    tm = min(block_rows, max(8, _round_up(pl.cdiv(rows_eff, 4), 8)))
    grid = (pl.cdiv(rows_eff, tm),)

    itemsize = jnp.dtype(x.dtype).itemsize
    cost = pl.CostEstimate(
        flops=2 * rows_eff * k * n,
        transcendentals=0,
        bytes_accessed=(rows_eff * k + k * n + rows_eff * n) * itemsize,
    )

    out_eff = pl.pallas_call(
        _linear_kernel,
        out_shape=jax.ShapeDtypeStruct((rows_eff, n), x.dtype),
        grid=grid,
        in_specs=[
            # Row tile of the (possibly slab-packed) input.
            pl.BlockSpec((tm, k), lambda i: (i, 0)),
            # Weight stays resident in VMEM across all row tiles.
            pl.BlockSpec((k, n), lambda i: (0, 0)),
        ],
        out_specs=pl.BlockSpec((tm, n), lambda i: (i, 0)),
        compiler_params=pltpu.CompilerParams(
            dimension_semantics=("parallel",),
            vmem_limit_bytes=32 * 1024 * 1024,
        ),
        cost_estimate=cost,
    )(x_eff, w_eff)

    # Row-major bytes of out_eff are exactly the unpadded output, so this
    # reshape is metadata-only (no extra HBM pass, no slice).
    return out_eff.reshape(B, L, d_model)


def time_feature_embedding(x, weight, *, min_rows_for_pallas: int = 1024):
    """Dispatcher: for tiny inputs let XLA fuse a plain matmul (Pallas launch
    overhead would dominate); otherwise use the tiled Pallas kernel."""
    B, L, _ = x.shape
    if B * L < min_rows_for_pallas:
        return jnp.einsum("bld,md->blm", x, weight)
    return time_feature_embedding_pallas(x, weight)


if __name__ == "__main__":
    # Module config: freq='h' -> d_inp = 4, small d_model = 32.
    d_inp = 4
    d_model = 32
    B, L = 2, 8

    key = jax.random.PRNGKey(0)
    k_x, k_w = jax.random.split(key)

    x = jax.random.normal(k_x, (B, L, d_inp), dtype=jnp.float32)
    bound = 1.0 / (d_inp ** 0.5)
    weight = jax.random.uniform(
        k_w, (d_model, d_inp), dtype=jnp.float32, minval=-bound, maxval=bound
    )

    # Call the Pallas path directly so the kernel is actually exercised
    # (the dispatcher would route this toy size to plain XLA).
    y = time_feature_embedding_pallas(x, weight)
    y = jax.block_until_ready(y)

    # Correctness check against plain-JAX reference.
    y_ref = jnp.einsum("bld,md->blm", x, weight)
    assert y.shape == (B, L, d_model)
    assert jnp.allclose(y, y_ref, atol=1e-5, rtol=1e-5)

    print("KERNEL_OK")
</pallas_src>

<mosaic_0001>
module attributes {stable_mosaic.version = 11 : i64} {
  func.func @_linear_kernel(%arg0: i32, %arg1: memref<8x16xf32, #tpu.memory_space<vmem>>, %arg2: memref<16x128xf32, #tpu.memory_space<vmem>>, %arg3: memref<8x128xf32, #tpu.memory_space<vmem>>) attributes {dimension_semantics = [#tpu.dimension_semantics<parallel>], iteration_bounds = array<i64: 1>, scalar_prefetch = 0 : i64, scratch_operands = 0 : i64, tpu.core_type = #tpu.core_type<tc>, window_params = [{transform_indices = @transform_0, window_bounds = array<i64: 8, 16>}, {pipeline_mode = #tpu.pipeline_mode<synchronous>, transform_indices = @transform_1, window_bounds = array<i64: 16, 128>}, {transform_indices = @transform_2, window_bounds = array<i64: 8, 128>}]} {
    %c0 = arith.constant 0 : index
    %c0_0 = arith.constant 0 : index
    %0 = vector.load %arg1[%c0, %c0_0] : memref<8x16xf32, #tpu.memory_space<vmem>>, vector<8x16xf32>
    %c0_1 = arith.constant 0 : index
    %c0_2 = arith.constant 0 : index
    %1 = vector.load %arg2[%c0_1, %c0_2] : memref<16x128xf32, #tpu.memory_space<vmem>>, vector<16x128xf32>
    %cst = arith.constant dense<0.000000e+00> : vector<8x128xf32>
    %2 = tpu.matmul %0, %1, %cst {dimension_numbers = #tpu.dot_dimension_numbers<[1], [0], [0], [1], [0, 0, 1, 1], [], []>} : vector<8x16xf32>, vector<16x128xf32>, vector<8x128xf32> -> vector<8x128xf32>
    %c0_3 = arith.constant 0 : index
    %c0_4 = arith.constant 0 : index
    %3 = vector.load %arg3[%c0_3, %c0_4] : memref<8x128xf32, #tpu.memory_space<vmem>>, vector<8x128xf32>
    tpu.vector_store %arg3[%c0_3, %c0_4], %2 {strides = array<i32>} : memref<8x128xf32, #tpu.memory_space<vmem>>, vector<8x128xf32>,
    return
  }
  func.func @transform_0(%arg0: i32) -> (i32, i32) {
    %c0_i32 = arith.constant 0 : i32
    %c0_i32_0 = arith.constant 0 : i32
    return %arg0, %c0_i32 : i32, i32
  }
  func.func @transform_1(%arg0: i32) -> (i32, i32) {
    %c0_i32 = arith.constant 0 : i32
    %c0_i32_0 = arith.constant 0 : i32
    %c0_i32_1 = arith.constant 0 : i32
    return %c0_i32, %c0_i32_0 : i32, i32
  }
  func.func @transform_2(%arg0: i32) -> (i32, i32) {
    %c0_i32 = arith.constant 0 : i32
    %c0_i32_0 = arith.constant 0 : i32
    return %arg0, %c0_i32 : i32, i32
  }
}

</mosaic_0001>

<llo_original>
// kernel: time_feature_embedding_pallas.1
$region0: #{time_feature_embedding_pallas.1}
  #allocation0 [shape = 'u32[]', space=smem, size = 0x4, offset = 0x4, fixed_abs, tag = 'smem constant byte address 0x4 - core index']
  #allocation1 [shape = 'u32[72,128]{1,0:T(1,128)}', space=vmem, size = 0x9000, scoped, tag = 'internal scratch']
  %s0 = inlined_call_operand.vmem [shape: f32[4,16], index: 0, kind: input, shape index: {}]
  %s1 = inlined_call_operand.vmem [shape: f32[16,128], index: 1, kind: input, shape index: {}]
  %s2 = inlined_call_operand.vmem [shape: f32[4,128], index: 2, kind: output, shape index: {}]
  %s3 = sld [smem:[#allocation0]]
  $region48: #{time_feature_embedding_pallas.1} parent=0
    _
  %s5 = ssub.s32 1, %s3
  %s6 = scalar_select 0, %s5, %s3
  $region1: #{time_feature_embedding_pallas.1} parent=0
    #allocation2 [shape = 'u8[4096]{0}', space=vmem, size = 0x1000, scoped, tag = 'output window, operand 0, single buffered']
    // Predicated region
    $region2: #{time_feature_embedding_pallas.1} parent=1 // pred_check
      _
    $region3: #{time_feature_embedding_pallas.1} parent=1 // pred_check_branch
      %8 = sbr.rel (0) target = $region5
    $region4: #{time_feature_embedding_pallas.1} parent=1 // pred_region
      _
    $region5: #{time_feature_embedding_pallas.1} parent=1 // pred_fallthru
      _
    // Predicated region
    $region6: #{time_feature_embedding_pallas.1} parent=1 // pred_check
      _
    $region7: #{time_feature_embedding_pallas.1} parent=1 // pred_check_branch
      %10 = sbr.rel (0) target = $region9
    $region8: #{time_feature_embedding_pallas.1} parent=1 // pred_region
      _
    $region9: #{time_feature_embedding_pallas.1} parent=1 // pred_fallthru
      _
    %v11 = vld [vmem:[%s0] sm:$0xff]
    %v12 = vld [vmem:[%s1] sm:$0xff]
    %v13 = vld [vmem:[%s1 + $0x8] sm:$0xff]
    %vm14 = vcmask 130048
    %v16 = vsel %vm14, %v11, 0
    %18 = vmatpush.msra.mxu0 0.0
    %19 = vmatpush.msra.mxu0 0.0
    %20 = vmatpush.msra.mxu0 0.0
    %21 = vmatpush.msra.mxu0 0.0
    %22 = vmatpush.msra.mxu0 0.0
    %23 = vmatpush.msra.mxu0 0.0
    %24 = vmatpush.msra.mxu0 0.0
    %25 = vmatpush.msra.mxu0 0.0
    %26 = vmatpush.msra.mxu0 0.0
    %27 = vmatpush.msra.mxu0 0.0
    %28 = vmatpush.msra.mxu0 0.0
    %29 = vmatpush.msra.mxu0 0.0
    %30 = vmatpush.msra.mxu0 0.0
    %31 = vmatpush.msra.mxu0 0.0
    %32 = vmatpush.msra.mxu0 %v13
    %33 = vmatpush.msra.mxu0 %v12
    %34 = vmatmul.f32.gmra.mxu0 %v16
    %v35 = vpop.f32.mrf.mxu0
    %v36 = vadd.f32 0.0, %v35
    %37 = vdwg.mxu0
    %38 = vst [vmem:[#allocation2] sm:$0xff] %v36
    // Predicated region
    $region10: #{time_feature_embedding_pallas.1} parent=1 // pred_check
      _
    $region11: #{time_feature_embedding_pallas.1} parent=1 // pred_check_branch
      %40 = sbr.rel (0) target = $region13
    $region12: #{time_feature_embedding_pallas.1} parent=1 // pred_region
      // Predicated region
      $region14: #{time_feature_embedding_pallas.1} parent=12 // pred_check
        _
      $region15: #{time_feature_embedding_pallas.1} parent=12 // pred_check_branch
        %42 = sbr.rel (0) target = $region17
      $region16: #{time_feature_embedding_pallas.1} parent=12 // pred_region
        // Predicated region
        $region18: #{time_feature_embedding_pallas.1} parent=16 // pred_check
          _
        $region19: #{time_feature_embedding_pallas.1} parent=16 // pred_check_branch
          %44 = sbr.rel target = $region21
        $region20: #{time_feature_embedding_pallas.1} parent=16 // pred_region
          // Predicated region
          $region33: #{time_feature_embedding_pallas.1} parent=20 // pred_check
            _
          $region34: #{time_feature_embedding_pallas.1} parent=20 // pred_check_branch
            %60 = sbr.rel (0) target = $region36
          $region35: #{time_feature_embedding_pallas.1} parent=20 // pred_region
            %s62 = ssub.s32 16, 1
            loop: start=0, step=1, limit=1
            $region37: #{time_feature_embedding_pallas.1} parent=35 // loop_pre_header
              _
            $region38: #{time_feature_embedding_pallas.1} parent=35 // loop_header
              %s64 = sphi 0, %s68
              %p65 = scmp.ge.s32.totalorder %s64, 1
              %s69 = sphi [#allocation2], [#allocation2]
              %s70 = sphi %s2, %s2
            $region39: #{time_feature_embedding_pallas.1} parent=35 // loop_header_branch
              %67 = sbr.rel (%p65) target = $region43
            $region40: #{time_feature_embedding_pallas.1} parent=35 // loop_body
              %v71 = vld [vmem:[%s69] sm:%s62]
              %72 = vst [vmem:[%s70] sm:%s62] %v71
            $region41: #{time_feature_embedding_pallas.1} parent=35 // loop_footer
              %s68 = sadd.s32 1, %s64
            $region42: #{time_feature_embedding_pallas.1} parent=35 // loop_footer_branch
              %63 = sbr.rel target = $region38
            $region43: #{time_feature_embedding_pallas.1} parent=35 // loop_exit
              _
          $region36: #{time_feature_embedding_pallas.1} parent=20 // pred_fallthru
            _
        $region21: #{time_feature_embedding_pallas.1} parent=16 // pred_fallthru
          _
        // Predicated region
        $region22: #{time_feature_embedding_pallas.1} parent=16 // pred_check
          _
        $region23: #{time_feature_embedding_pallas.1} parent=16 // pred_check_branch
          %46 = sbr.rel (0) target = $region25
        $region24: #{time_feature_embedding_pallas.1} parent=16 // pred_region
          %s48 = ssub.s32 16, 1
          loop: start=0, step=1, limit=1
          $region26: #{time_feature_embedding_pallas.1} parent=24 // loop_pre_header
            _
          $region27: #{time_feature_embedding_pallas.1} parent=24 // loop_header
            %s50 = sphi 0, %s54
            %p51 = scmp.ge.s32.totalorder %s50, 1
            %s55 = sphi [#allocation2], [#allocation2]
            %s56 = sphi %s2, %s2
          $region28: #{time_feature_embedding_pallas.1} parent=24 // loop_header_branch
            %53 = sbr.rel (%p51) target = $region32
          $region29: #{time_feature_embedding_pallas.1} parent=24 // loop_body
            %v57 = vld [vmem:[%s55] sm:%s48]
            %58 = vst [vmem:[%s56] sm:%s48] %v57
          $region30: #{time_feature_embedding_pallas.1} parent=24 // loop_footer
            %s54 = sadd.s32 1, %s50
          $region31: #{time_feature_embedding_pallas.1} parent=24 // loop_footer_branch
            %49 = sbr.rel target = $region27
          $region32: #{time_feature_embedding_pallas.1} parent=24 // loop_exit
            _
        $region25: #{time_feature_embedding_pallas.1} parent=16 // pred_fallthru
          _
      $region17: #{time_feature_embedding_pallas.1} parent=12 // pred_fallthru
        _
      %73 = vnop
    $region13: #{time_feature_embedding_pallas.1} parent=1 // pred_fallthru
      _
    // Predicated region
    $region44: #{time_feature_embedding_pallas.1} parent=1 // pred_check
      _
    $region45: #{time_feature_embedding_pallas.1} parent=1 // pred_check_branch
      %75 = sbr.rel (0) target = $region47
    $region46: #{time_feature_embedding_pallas.1} parent=1 // pred_region
      _
    $region47: #{time_feature_embedding_pallas.1} parent=1 // pred_fallthru
      _

</llo_original>
